<compile_context>
chip_gen: v6e
topology: v6e:2x2x1
jax: 0.10.0
libtpu: 0.0.40
codegen_flags: <defaults>
</compile_context>

<pallas_src>
import numpy as np
import jax
import jax.numpy as jnp
from jax.experimental import pallas as pl
from jax.experimental.pallas import tpu as pltpu

BN_EPS = 1e-5
_NEG_LARGE = -1e30  # -inf stand-in for max-pool padding (finite: avoids inf*0)

_VMEM = pl.BlockSpec(memory_space=pltpu.MemorySpace.VMEM)


# ----------------------- pltpu.roll direction probe ------------------------ #

_ROLL_SIGN_CACHE = []


def _roll_sign():
    """+1 if pltpu.roll follows jnp.roll semantics (out[j] = x[j - shift]),
    -1 if it rotates the other way. Probed once with a tiny kernel so the
    fused kernel stays correct across jax versions."""
    if not _ROLL_SIGN_CACHE:
        def probe(x_ref, o_ref):
            o_ref[...] = pltpu.roll(x_ref[...], 1, axis=1)

        x = jnp.tile(jnp.arange(128, dtype=jnp.float32)[None, :], (8, 1))
        y = pl.pallas_call(
            probe,
            out_shape=jax.ShapeDtypeStruct((8, 128), jnp.float32),
            in_specs=[_VMEM],
            out_specs=_VMEM,
        )(x)
        v = float(y[0, 0])
        if v == 127.0:
            _ROLL_SIGN_CACHE.append(1)
        elif v == 1.0:
            _ROLL_SIGN_CACHE.append(-1)
        else:
            raise RuntimeError(f"unexpected pltpu.roll behaviour: {v}")
    return _ROLL_SIGN_CACHE[0]


# --------------------- constant builders (trace-time numpy) ---------------- #

def _bilinear_matrix(n_in, n_out):
    """torch Upsample(mode='bilinear', align_corners=True) interpolation matrix."""
    A = np.zeros((n_out, n_in), np.float32)
    if n_out == 1 or n_in == 1:
        A[:, 0] = 1.0
        return A
    src = np.arange(n_out) * (n_in - 1) / (n_out - 1)
    i0 = np.floor(src).astype(np.int64)
    i1 = np.minimum(i0 + 1, n_in - 1)
    w1 = (src - i0).astype(np.float32)
    A[np.arange(n_out), i0] += 1.0 - w1
    A[np.arange(n_out), i1] += w1
    return A


def _shift_masks(N, H, W):
    """(9, 1, N*H*W) 0/1 masks: tap (ky,kx) is in-bounds at flattened col j."""
    S = N * H * W
    j = np.arange(S)
    w = j % W
    h = (j // W) % H
    m = np.zeros((9, 1, S), np.float32)
    for ky in range(3):
        for kx in range(3):
            dy, dx = ky - 1, kx - 1
            valid = (h + dy >= 0) & (h + dy < H) & (w + dx >= 0) & (w + dx < W)
            m[ky * 3 + kx, 0, :] = valid
    return m


def _pool_select(N, H, W):
    """0/1 (N*H*W, N*Ho*Wo) matrix picking the stride-2 window centers."""
    Ho = (H + 2 - 3) // 2 + 1
    Wo = (W + 2 - 3) // 2 + 1
    sel = np.zeros((N * H * W, N * Ho * Wo), np.float32)
    for n in range(N):
        for ho in range(Ho):
            for wo in range(Wo):
                sel[n * H * W + 2 * ho * W + 2 * wo,
                    n * Ho * Wo + ho * Wo + wo] = 1.0
    return sel


def _upsample_matrix(N, H, W):
    """(N*H*W, N*2H*2W) bilinear-x2 align_corners interpolation matrix
    (block-diagonal over the batch) for the flattened (C, N*H*W) layout."""
    B = np.kron(_bilinear_matrix(H, 2 * H), _bilinear_matrix(W, 2 * W))  # (HoWo, HW)
    return np.kron(np.eye(N, dtype=np.float32), B.T).astype(np.float32)


# ------------------------------ fused kernel ------------------------------- #

def _make_fused_kernel(w_big, w_small, roll_sign):
    """w_big / w_small: row widths (pixels) of the full- and half-res planes."""

    def _shift(x, off):
        """Columns shifted so out[:, j] = x[:, j + off] (circular, static off)."""
        s = x.shape[1]
        amt = ((-off) if roll_sign == 1 else off) % s
        if amt == 0:
            return x
        return pltpu.roll(x, amt, axis=1)

    def _conv3x3_bn(x, w9_ref, g_ref, beta_ref, m_ref, w_px):
        """3x3 same-conv (stride 1) + BatchNorm(batch stats) on a (C, S) tile.

        Conv bias is omitted on purpose: a per-channel constant is removed
        exactly by the training-mode BatchNorm mean that follows, so adding it
        would be a wasted full-tile pass. LeakyReLU(True) == slope 1.0 ==
        identity, also removed."""
        c_out = w9_ref.shape[1]
        s = x.shape[1]
        acc = jnp.zeros((c_out, s), jnp.float32)
        for ky in range(3):
            for kx in range(3):
                k = ky * 3 + kx
                off = (ky - 1) * w_px + (kx - 1)
                xs = x if off == 0 else _shift(x, off) * m_ref[k]
                acc = acc + jnp.dot(w9_ref[k], xs,
                                    preferred_element_type=jnp.float32)
        mean = jnp.mean(acc, axis=1, keepdims=True)
        var = jnp.mean((acc - mean) ** 2, axis=1, keepdims=True)   # biased var
        scale = g_ref[...] * jax.lax.rsqrt(var + BN_EPS)            # (C,1)
        shift = beta_ref[...] - mean * scale                        # (C,1)
        return acc * scale + shift                                  # 2-pass BN

    def _maxpool3x3_s2(y, m_ref, sel_ref, w_px):
        """MaxPool2d(3, s=2, p=1) on (C, S): 9-way max + stride-2 select matmul."""
        pooled = y  # center tap, always valid
        for ky in range(3):
            for kx in range(3):
                off = (ky - 1) * w_px + (kx - 1)
                if off == 0:
                    continue
                k = ky * 3 + kx
                ys = jnp.where(m_ref[k] != 0.0, _shift(y, off), _NEG_LARGE)
                pooled = jnp.maximum(pooled, ys)
        return jnp.dot(pooled, sel_ref[...], preferred_element_type=jnp.float32)

    def kernel(x_ref,
               e0_w_ref, e0_g_ref, e0_bt_ref,
               e1_w_ref, e1_g_ref, e1_bt_ref,
               d0_w_ref, d0_g_ref, d0_bt_ref,
               d1_w_ref, d1_g_ref, d1_bt_ref,
               fw_ref, fb_ref,
               m_big_ref, m_small_ref, sel0_ref, sel1_ref, up0_ref, up1_ref,
               xrec_ref, z_ref):
        x = x_ref[...]
        # ---- encoder layer 0 (full res) ----
        y = _conv3x3_bn(x, e0_w_ref, e0_g_ref, e0_bt_ref, m_big_ref, w_big)
        h = _maxpool3x3_s2(y, m_big_ref, sel0_ref, w_big)
        # ---- encoder layer 1 (half res) ----
        y = _conv3x3_bn(h, e1_w_ref, e1_g_ref, e1_bt_ref, m_small_ref, w_small)
        z = _maxpool3x3_s2(y, m_small_ref, sel1_ref, w_small)
        z_ref[...] = z
        # ---- decoder layer 0: upsample x2 + conv (half res) ----
        h = jnp.dot(z, up0_ref[...], preferred_element_type=jnp.float32)
        h = _conv3x3_bn(h, d0_w_ref, d0_g_ref, d0_bt_ref, m_small_ref, w_small)
        # ---- decoder layer 1: upsample x2 + conv (full res) ----
        h = jnp.dot(h, up1_ref[...], preferred_element_type=jnp.float32)
        h = _conv3x3_bn(h, d1_w_ref, d1_g_ref, d1_bt_ref, m_big_ref, w_big)
        # ---- final 1x1 conv + sigmoid ----
        out = jnp.dot(fw_ref[...], h, preferred_element_type=jnp.float32)
        xrec_ref[...] = jax.nn.sigmoid(out + fb_ref[...])

    return kernel


# ------------------------------ forward wrapper ----------------------------- #

def conv_autoencoder_forward(x, params, roll_sign=None):
    """Mirrors ConvAutoEncoder.forward: returns (x_reconstructed, {'z': z})."""
    assert len(params["encoder"]) == 2 and len(params["decoder"]) == 2
    if roll_sign is None:
        roll_sign = _roll_sign()

    N, c_in, H, W = x.shape
    H1, W1 = (H + 2 - 3) // 2 + 1, (W + 2 - 3) // 2 + 1      # after pool 0
    H2, W2 = (H1 + 2 - 3) // 2 + 1, (W1 + 2 - 3) // 2 + 1    # after pool 1
    assert (2 * H2, 2 * W2) == (H1, W1) and (2 * H1, 2 * W1) == (H, W)

    # constant gather/interp matrices & masks (folded to constants under jit)
    m_big = jnp.asarray(_shift_masks(N, H, W))
    m_small = jnp.asarray(_shift_masks(N, H1, W1))
    sel0 = jnp.asarray(_pool_select(N, H, W))
    sel1 = jnp.asarray(_pool_select(N, H1, W1))
    up0 = jnp.asarray(_upsample_matrix(N, H2, W2))            # (N*H2*W2, N*H1*W1)
    up1 = jnp.asarray(_upsample_matrix(N, H1, W1))            # (N*H1*W1, N*H*W)

    def conv_operands(layer):
        w = layer["w"]
        c_out, c_i = w.shape[0], w.shape[1]
        w9 = jnp.transpose(w, (2, 3, 0, 1)).reshape(9, c_out, c_i)
        # conv bias intentionally not passed: it cancels under batch-stat BN.
        return (w9,
                layer["gamma"].reshape(c_out, 1),
                layer["beta"].reshape(c_out, 1))

    e0 = conv_operands(params["encoder"][0])
    e1 = conv_operands(params["encoder"][1])
    d0 = conv_operands(params["decoder"][0])
    d1 = conv_operands(params["decoder"][1])
    wf = params["final"]["w"]
    out_ch = wf.shape[0]
    fw = wf.reshape(out_ch, wf.shape[1])
    fb = params["final"]["b"].reshape(out_ch, 1)
    c_lat = params["encoder"][1]["w"].shape[0]

    x_flat = jnp.transpose(x, (1, 0, 2, 3)).reshape(c_in, N * H * W)

    operands = (x_flat, *e0, *e1, *d0, *d1, fw, fb,
                m_big, m_small, sel0, sel1, up0, up1)

    kernel = _make_fused_kernel(W, W1, roll_sign)
    x_rec_flat, z_flat = pl.pallas_call(
        kernel,
        out_shape=(jax.ShapeDtypeStruct((out_ch, N * H * W), jnp.float32),
                   jax.ShapeDtypeStruct((c_lat, N * H2 * W2), jnp.float32)),
        in_specs=[_VMEM] * len(operands),
        out_specs=(_VMEM, _VMEM),
    )(*operands)

    x_rec = x_rec_flat.reshape(out_ch, N, H, W).transpose(1, 0, 2, 3)
    z = z_flat.reshape(c_lat, N, H2, W2).transpose(1, 0, 2, 3)
    return x_rec, {"z": z}


# ------------------------------- model setup -------------------------------- #

def init_params(key, in_channels, channels, out_ch, kernel_size=3):
    """Deterministic synthetic parameters matching ConvAutoEncoder.__init__ shapes."""
    def conv_init(key, c_out, c_in, k):
        kw, kb = jax.random.split(key)
        w = 0.1 * jax.random.normal(kw, (c_out, c_in, k, k), jnp.float32)
        b = 0.05 * jax.random.normal(kb, (c_out,), jnp.float32)
        return w, b

    keys = jax.random.split(key, 8)
    params = {"encoder": [], "decoder": [], "final": None}

    # Encoder: encoder_channels = channels + [channels[-1]]; zip with strides (len==2)
    enc_channels = list(channels) + [channels[-1]]
    layer_c = in_channels
    for i, c in enumerate(enc_channels[: len(channels)]):
        w, b = conv_init(keys[i], c, layer_c, kernel_size)
        params["encoder"].append(
            {"w": w, "b": b,
             "gamma": jnp.ones((c,), jnp.float32), "beta": jnp.zeros((c,), jnp.float32)})
        layer_c = c

    # Decoder: decode_channel_list = reversed(channels) + [channels[0]]; 2 layers used
    dec_channels = list(reversed(channels)) + [channels[0]]
    layer_c = channels[-1]
    for i, c in enumerate(dec_channels[: len(channels)]):
        w, b = conv_init(keys[3 + i], c, layer_c, kernel_size)
        params["decoder"].append(
            {"w": w, "b": b,
             "gamma": jnp.ones((c,), jnp.float32), "beta": jnp.zeros((c,), jnp.float32)})
        layer_c = c

    wf, bf = conv_init(keys[7], out_ch, layer_c, 1)
    params["final"] = {"w": wf, "b": bf}
    return params


# ---------------------- pure-XLA reference (validation) --------------------- #

def _reference_forward(x, params):
    hp = jax.lax.Precision.HIGHEST

    def conv_bn(h, layer):
        y = jax.lax.conv_general_dilated(
            h, layer["w"], window_strides=(1, 1), padding=((1, 1), (1, 1)),
            dimension_numbers=("NCHW", "OIHW", "NCHW"), precision=hp)
        y = y + layer["b"][None, :, None, None]
        mean = jnp.mean(y, axis=(0, 2, 3), keepdims=True)
        var = jnp.mean((y - mean) ** 2, axis=(0, 2, 3), keepdims=True)
        y = (y - mean) * jax.lax.rsqrt(var + BN_EPS)
        return y * layer["gamma"][None, :, None, None] + layer["beta"][None, :, None, None]

    def maxpool(h):
        return jax.lax.reduce_window(
            h, -jnp.inf, jax.lax.max, (1, 1, 3, 3), (1, 1, 2, 2),
            ((0, 0), (0, 0), (1, 1), (1, 1)))

    def upsample(h):
        _, _, hh, ww = h.shape
        ah = jnp.asarray(_bilinear_matrix(hh, 2 * hh))
        aw = jnp.asarray(_bilinear_matrix(ww, 2 * ww))
        return jnp.einsum("oh,nchw,pw->ncop", ah, h, aw, precision=hp)

    h = x
    for layer in params["encoder"]:
        h = maxpool(conv_bn(h, layer))
    z = h
    for layer in params["decoder"]:
        h = conv_bn(upsample(h), layer)
    wfin = params["final"]["w"][:, :, 0, 0]
    y = jnp.einsum("oc,nchw->nohw", wfin, h, precision=hp)
    y = y + params["final"]["b"][None, :, None, None]
    return jax.nn.sigmoid(y), z


if __name__ == "__main__":
    in_channels, channels, out_ch, strides = 4, [8, 16], 4, [2, 2]
    x = jax.random.normal(jax.random.PRNGKey(0), (2, in_channels, 16, 16), jnp.float32)
    params = init_params(jax.random.PRNGKey(42), in_channels, channels, out_ch)

    roll_sign = _roll_sign()  # probe once, outside jit
    fwd = jax.jit(lambda xx: conv_autoencoder_forward(xx, params, roll_sign))

    x_rec, aux = fwd(x)
    x_rec = jax.block_until_ready(x_rec)
    z = jax.block_until_ready(aux["z"])

    assert x_rec.shape == (2, out_ch, 16, 16), x_rec.shape
    assert z.shape == (2, channels[-1], 4, 4), z.shape
    assert bool(jnp.all(jnp.isfinite(x_rec))) and bool(jnp.all(jnp.isfinite(z)))
    assert bool(jnp.all(x_rec >= 0.0)) and bool(jnp.all(x_rec <= 1.0))  # sigmoid range

    # numerics check against a pure-XLA implementation of the same module
    x_ref, z_ref = _reference_forward(x, params)
    np.testing.assert_allclose(np.asarray(z), np.asarray(z_ref), rtol=2e-2, atol=2e-2)
    np.testing.assert_allclose(np.asarray(x_rec), np.asarray(x_ref), rtol=2e-2, atol=2e-2)

    print("KERNEL_OK")
</pallas_src>

<mosaic_0001>
module attributes {stable_mosaic.version = 11 : i64} {
  func.func @probe(%arg0: memref<8x128xf32, #tpu.memory_space<vmem>>, %arg1: memref<8x128xf32, #tpu.memory_space<vmem>>) attributes {dimension_semantics = [], scalar_prefetch = 0 : i64, scratch_operands = 0 : i64, tpu.core_type = #tpu.core_type<tc>} {
    %c0 = arith.constant 0 : index
    %c0_0 = arith.constant 0 : index
    %0 = vector.load %arg0[%c0, %c0_0] : memref<8x128xf32, #tpu.memory_space<vmem>>, vector<8x128xf32>
    %c1_i32 = arith.constant 1 : i32
    %1 = tpu.dynamic_rotate %0 by %c1_i32 dim 1 : vector<8x128xf32>, i32 -> vector<8x128xf32>
    %c0_1 = arith.constant 0 : index
    %c0_2 = arith.constant 0 : index
    %2 = vector.load %arg1[%c0_1, %c0_2] : memref<8x128xf32, #tpu.memory_space<vmem>>, vector<8x128xf32>
    tpu.vector_store %arg1[%c0_1, %c0_2], %1 {strides = array<i32>} : memref<8x128xf32, #tpu.memory_space<vmem>>, vector<8x128xf32>,
    return
  }
}

</mosaic_0001>

<llo_original>
// kernel: tpu_custom_call.1
$region0: #{tpu_custom_call.1}
  #allocation0 [shape = 'u32[]', space=smem, size = 0x4, offset = 0x4, fixed_abs, tag = 'smem constant byte address 0x4 - core index']
  #allocation1 [shape = 'u32[144,128]{1,0:T(1,128)}', space=vmem, size = 0x12000, scoped, tag = 'internal scratch']
  %s0 = inlined_call_operand.hbm [shape: f32[8,128], index: 0, kind: input, shape index: {}]
  %s1 = inlined_call_operand.hbm [shape: f32[8,128], index: 1, kind: output, shape index: {}]
  %s2 = sld [smem:[#allocation0]]
  $region18: #{tpu_custom_call.1} parent=0
    _
  %s4 = ssub.s32 1, %s2
  %s5 = scalar_select 0, %s4, %s2
  $region1: #{tpu_custom_call.1} parent=0
    #allocation2 [shape = 'u8[4096]{0}', space=vmem, size = 0x1000, scoped, tag = 'input window, operand 0, single buffered']
    #allocation3 [shape = 's32[1]{0}', space=sflag, size = 0x4, scoped, tag = 'scoped memory for tpu_custom_call.1']
    #allocation4 [shape = 's32[1]{0}', space=sflag, size = 0x4, scoped, tag = 'scoped memory for tpu_custom_call.1']
    #allocation5 [shape = 'u8[4096]{0}', space=vmem, size = 0x1000, scoped, tag = 'output window, operand 0, single buffered']
    %6 = vsyncpa [#allocation3], 0
    %7 = vsyncpa [#allocation4], 0
    // Predicated region
    $region2: #{tpu_custom_call.1} parent=1 // pred_check
      _
    $region3: #{tpu_custom_call.1} parent=1 // pred_check_branch
      %9 = sbr.rel (0) target = $region5
    $region4: #{tpu_custom_call.1} parent=1 // pred_region
      %s11 = ssub.s32 128, 128
      %12 = vsyncadd [#allocation3], %s11
      %s14 = sshll.u32 [#allocation2], 4
      %s15 = int_to_ptr.vmem [resolvable:$true] %s14
      %17 = dma.hbm_to_vmem [thread:$0]  %s0, 128, %s15, [#allocation3]
    $region5: #{tpu_custom_call.1} parent=1 // pred_fallthru
      _
    // Predicated region
    $region6: #{tpu_custom_call.1} parent=1 // pred_check
      _
    $region7: #{tpu_custom_call.1} parent=1 // pred_check_branch
      %19 = sbr.rel (0) target = $region9
    $region8: #{tpu_custom_call.1} parent=1 // pred_region
      %20 = dma.done [#allocation3], 128
    $region9: #{tpu_custom_call.1} parent=1 // pred_fallthru
      _
    %v21 = vld [vmem:[#allocation2] sm:$0xff]
    %22 = vrot.lane.b32.xlu0 %v21, 1
    %v23 = vpop.permute.xlu0 %22
    %24 = vst [vmem:[#allocation5] sm:$0xff] %v23
    // Predicated region
    $region10: #{tpu_custom_call.1} parent=1 // pred_check
      _
    $region11: #{tpu_custom_call.1} parent=1 // pred_check_branch
      %26 = sbr.rel (0) target = $region13
    $region12: #{tpu_custom_call.1} parent=1 // pred_region
      %s28 = ssub.s32 128, 128
      %29 = vsyncadd [#allocation4], %s28
      %s31 = sshll.u32 [#allocation5], 4
      %s32 = int_to_ptr.vmem [resolvable:$true] %s31
      %34 = dma.vmem_to_hbm [thread:$0]  %s32, 128, %s1, [#allocation4]
    $region13: #{tpu_custom_call.1} parent=1 // pred_fallthru
      _
    // Predicated region
    $region14: #{tpu_custom_call.1} parent=1 // pred_check
      _
    $region15: #{tpu_custom_call.1} parent=1 // pred_check_branch
      %36 = sbr.rel (0) target = $region17
    $region16: #{tpu_custom_call.1} parent=1 // pred_region
      %37 = dma.done [#allocation4], 128
    $region17: #{tpu_custom_call.1} parent=1 // pred_fallthru
      _
    %38 = vsyncpa [#allocation3], 1
    %39 = vsyncpa [#allocation4], 1

</llo_original>
